<compile_context>
chip_gen: v6e
topology: v6e:2x2x1
jax: 0.10.0
libtpu: 0.0.40
codegen_flags: <defaults>
</compile_context>

<pallas_src>
import math
import jax
import jax.numpy as jnp
from jax.experimental import pallas as pl
from jax.experimental.pallas import tpu as pltpu


def _round_up(n: int, m: int) -> int:
    return ((n + m - 1) // m) * m


def _device_default_tiles():
    """(tm, tf) defaults per TPU generation."""
    kind = jax.devices()[0].device_kind.lower()
    if "v7" in kind:
        return 256, 256     # 64 MiB VMEM/TC: keep the resident set small
    if "v6" in kind:
        return 512, 512     # 128 MiB VMEM: halve weight-DMA bytes per FLOP
    return 256, 512         # v5e and others: already near DMA/MXU balance


def _vmem_capacity_bytes() -> int:
    try:
        return int(pltpu.get_tpu_info().vmem_capacity_bytes)
    except Exception:
        kind = jax.devices()[0].device_kind.lower()
        return (64 if "v7" in kind else 128) * 1024 * 1024


# ----------------------------------------------------------------------------
# Kernel
# ----------------------------------------------------------------------------
def silu_ffn_kernel(x_ref, w1t_ref, w2t_ref, o_ref, acc_ref):
    # x_ref:   (tm, d_model)     compute dtype (bf16 by default)
    # w1t_ref: (d_model, tf)     k-th column slab of W1^T
    # w2t_ref: (tf, d_model)     k-th row slab of W2^T
    # o_ref:   (tm, d_model)     output dtype (caller's dtype)
    # acc_ref: (tm, d_model) f32 scratch, resident across the k axis
    k = pl.program_id(1)
    nk = pl.num_programs(1)   # static for a static grid

    # h_k = x @ W1T_k  -> (tm, tf), f32 accumulation on the MXU
    h = jnp.dot(x_ref[...], w1t_ref[...], preferred_element_type=jnp.float32)
    # SiLU in f32 (VPU mul + EUP sigmoid)
    h = h * jax.nn.sigmoid(h)
    # contribution of this d_ff slab: silu(h_k) @ W2T_k -> (tm, d_model) f32
    contrib = jnp.dot(h.astype(w2t_ref.dtype), w2t_ref[...],
                      preferred_element_type=jnp.float32)

    if nk == 1:
        # Single d_ff slab: no accumulator traffic at all.
        o_ref[...] = contrib.astype(o_ref.dtype)
    else:
        @pl.when(k == 0)
        def _():                                   # first slab: overwrite acc
            acc_ref[...] = contrib

        @pl.when(jnp.logical_and(k > 0, k != nk - 1))
        def _():                                   # middle slabs: accumulate
            acc_ref[...] += contrib

        @pl.when(k == nk - 1)
        def _():                                   # last slab: fused add+store
            o_ref[...] = (acc_ref[...] + contrib).astype(o_ref.dtype)


# ----------------------------------------------------------------------------
# One-time weight preparation (hoist out of the per-call hot path)
# ----------------------------------------------------------------------------
def prepare_weights(w1, w2, *, tf=None, compute_dtype=jnp.bfloat16):
    """Transpose, cast to the MXU compute dtype, and zero-pad d_ff to the tf
    grid.  Do this ONCE at parameter-init time -- it reads/writes both full
    weight matrices in HBM and would otherwise dominate decode-sized calls.

    Returns (w1t, w2t, tf_eff):
      w1t: (d_model, d_ff_padded), w2t: (d_ff_padded, d_model).
    Zero padding is exact because silu(0) == 0.
    """
    if tf is None:
        _, tf = _device_default_tiles()
    d_ff, d_model = w1.shape
    assert w2.shape == (d_model, d_ff)

    w1t = jnp.transpose(w1).astype(compute_dtype)   # (d_model, d_ff)
    w2t = jnp.transpose(w2).astype(compute_dtype)   # (d_ff, d_model)

    if d_ff <= tf:
        tf_eff = d_ff
    else:
        assert tf % 128 == 0, "d_ff tile must be a multiple of 128"
        tf_eff = tf
        dff_pad = _round_up(d_ff, tf_eff)
        if dff_pad != d_ff:
            w1t = jnp.pad(w1t, ((0, 0), (0, dff_pad - d_ff)))
            w2t = jnp.pad(w2t, ((0, dff_pad - d_ff), (0, 0)))
    return w1t, w2t, tf_eff


# ----------------------------------------------------------------------------
# FFN with pre-prepared weights (the hot path)
# ----------------------------------------------------------------------------
def silu_ffn_prepared(x, w1t, w2t, tf_eff, *, tm=None):
    """x: (..., d_model); w1t/w2t as returned by prepare_weights."""
    compute_dtype = w1t.dtype
    out_dtype = x.dtype
    orig_shape = x.shape
    d_model = orig_shape[-1]
    dff_pad = w1t.shape[1]
    assert w1t.shape == (d_model, dff_pad)
    assert w2t.shape == (dff_pad, d_model)
    assert dff_pad % tf_eff == 0

    if tm is None:
        tm, _ = _device_default_tiles()

    x2d = x.reshape(-1, d_model).astype(compute_dtype)
    M = x2d.shape[0]

    # --- row tiling: pad M so the grid is exact ---------------------------
    # bf16 packs 2 rows per sublane -> align to 16 rows; f32 -> 8.
    row_align = max(8, 32 // jnp.dtype(compute_dtype).itemsize)
    m_pad = max(_round_up(M, row_align), row_align)
    tm_eff = min(tm, m_pad)
    assert tm_eff % row_align == 0
    m_pad = _round_up(m_pad, tm_eff)
    if m_pad != M:
        x2d = jnp.pad(x2d, ((0, m_pad - M), (0, 0)))

    grid = (m_pad // tm_eff, dff_pad // tf_eff)

    # --- honest VMEM budget, clamped to physical capacity -----------------
    cd = jnp.dtype(compute_dtype).itemsize
    od = jnp.dtype(out_dtype).itemsize
    est_bytes = (
        2 * tm_eff * d_model * cd        # x tiles (double buffered)
        + 2 * d_model * tf_eff * cd      # W1^T slabs
        + 2 * tf_eff * d_model * cd      # W2^T slabs
        + 2 * tm_eff * d_model * od      # out tiles
        + tm_eff * d_model * 4           # f32 acc scratch
        + tm_eff * tf_eff * 4            # f32 h intermediate
        + tm_eff * d_model * 4           # f32 per-step contrib temp
        + (2 << 20)                      # Mosaic internal scratch allowance
    )
    cap = _vmem_capacity_bytes()
    headroom = 2 << 20
    if est_bytes > cap - headroom:
        raise ValueError(
            f"silu_ffn tile config (tm={tm_eff}, tf={tf_eff}, d_model={d_model}, "
            f"compute={compute_dtype}) needs ~{est_bytes >> 20} MiB VMEM but the "
            f"device has {cap >> 20} MiB; reduce tm/tf or use bf16 compute.")
    vmem_limit = min(max(int(est_bytes * 1.25), 32 << 20), cap - headroom)

    out2d = pl.pallas_call(
        silu_ffn_kernel,
        out_shape=jax.ShapeDtypeStruct((m_pad, d_model), out_dtype),
        grid_spec=pltpu.PrefetchScalarGridSpec(
            num_scalar_prefetch=0,
            grid=grid,
            in_specs=[
                pl.BlockSpec((tm_eff, d_model), lambda i, k: (i, 0)),   # x rows
                pl.BlockSpec((d_model, tf_eff), lambda i, k: (0, k)),   # W1^T slab
                pl.BlockSpec((tf_eff, d_model), lambda i, k: (k, 0)),   # W2^T slab
            ],
            out_specs=pl.BlockSpec((tm_eff, d_model), lambda i, k: (i, 0)),
            scratch_shapes=[pltpu.VMEM((tm_eff, d_model), jnp.float32)],
        ),
        compiler_params=pltpu.CompilerParams(
            dimension_semantics=("parallel", "arbitrary"),
            vmem_limit_bytes=vmem_limit,
        ),
    )(x2d, w1t, w2t)

    if m_pad != M:
        out2d = out2d[:M]
    return out2d.reshape(orig_shape)


def silu_ffn(x, w1, w2, *, tm=None, tf=None, compute_dtype=jnp.bfloat16):
    """Convenience wrapper (prep + run).  For repeated calls, hoist
    prepare_weights to init time and call silu_ffn_prepared directly."""
    w1t, w2t, tf_eff = prepare_weights(w1, w2, tf=tf, compute_dtype=compute_dtype)
    return silu_ffn_prepared(x, w1t, w2t, tf_eff, tm=tm)


# ----------------------------------------------------------------------------
# Param init matching the PyTorch module
# ----------------------------------------------------------------------------
def trunc_normal(key, shape, std):
    # matches nn.init.trunc_normal_(mean=0, std=std, a=-3*std, b=3*std)
    return std * jax.random.truncated_normal(key, -3.0, 3.0, shape, jnp.float32)


def init_params(key, d_model, d_ff):
    k1, k2 = jax.random.split(key)
    std1 = math.sqrt(2.0 / (d_ff + d_model))
    std2 = math.sqrt(2.0 / (d_model + d_ff))
    w1 = trunc_normal(k1, (d_ff, d_model), std1)   # W1: (d_ff, d_model)
    w2 = trunc_normal(k2, (d_model, d_ff), std2)   # W2: (d_model, d_ff)
    return w1, w2


def _ref(x, w1, w2):
    h = x @ w1.T
    h = h * jax.nn.sigmoid(h)
    return h @ w2.T


if __name__ == "__main__":
    key = jax.random.PRNGKey(0)

    # --- test 1: toy module config, bf16 compute, hoisted weight prep -----
    batch, seq, d_model, d_ff = 2, 8, 32, 128
    k1, k2, key = jax.random.split(key, 3)
    x = jax.random.normal(k1, (batch, seq, d_model), jnp.float32)
    w1, w2 = init_params(k2, d_model, d_ff)

    # One-time layout plumbing (would live at parameter-init time).
    w1t, w2t, tf_eff = prepare_weights(w1, w2)     # bf16 by default
    out = silu_ffn_prepared(x, w1t, w2t, tf_eff)
    jax.block_until_ready(out)
    ref = _ref(x, w1, w2)
    assert out.shape == (batch, seq, d_model)
    assert out.dtype == x.dtype
    assert jnp.allclose(out, ref, atol=3e-2, rtol=3e-2)   # bf16 MXU path

    # --- test 2: row padding + multi-step d_ff reduction, exact f32 path --
    batch2, seq2, d_model2, d_ff2 = 3, 5, 64, 256          # M=15 -> padded
    k3, k4, key = jax.random.split(key, 3)
    x2 = jax.random.normal(k3, (batch2, seq2, d_model2), jnp.float32)
    w1b, w2b = init_params(k4, d_model2, d_ff2)

    out2 = silu_ffn(x2, w1b, w2b, tm=16, tf=128,           # 2-step k grid
                    compute_dtype=jnp.float32)
    jax.block_until_ready(out2)
    ref2 = _ref(x2, w1b, w2b)
    assert out2.shape == (batch2, seq2, d_model2)
    assert jnp.allclose(out2, ref2, atol=1e-4, rtol=1e-4)

    print("KERNEL_OK")
</pallas_src>

<mosaic_0001>
module attributes {stable_mosaic.version = 11 : i64} {
  func.func @silu_ffn_kernel(%arg0: i32, %arg1: i32, %arg2: memref<16x32xbf16, #tpu.memory_space<vmem>>, %arg3: memref<32x128xbf16, #tpu.memory_space<vmem>>, %arg4: memref<128x32xbf16, #tpu.memory_space<vmem>>, %arg5: memref<16x32xf32, #tpu.memory_space<vmem>>, %arg6: memref<16x32xf32, #tpu.memory_space<vmem>>) attributes {dimension_semantics = [#tpu.dimension_semantics<parallel>, #tpu.dimension_semantics<arbitrary>], iteration_bounds = array<i64: 1, 1>, scalar_prefetch = 0 : i64, scratch_operands = 1 : i64, tpu.core_type = #tpu.core_type<tc>, window_params = [{transform_indices = @transform_0, window_bounds = array<i64: 16, 32>}, {transform_indices = @transform_1, window_bounds = array<i64: 32, 128>}, {transform_indices = @transform_2, window_bounds = array<i64: 128, 32>}, {transform_indices = @transform_3, window_bounds = array<i64: 16, 32>}]} {
    %c0 = arith.constant 0 : index
    %c0_0 = arith.constant 0 : index
    %0 = vector.load %arg2[%c0, %c0_0] : memref<16x32xbf16, #tpu.memory_space<vmem>>, vector<16x32xbf16>
    %c0_1 = arith.constant 0 : index
    %c0_2 = arith.constant 0 : index
    %1 = vector.load %arg3[%c0_1, %c0_2] : memref<32x128xbf16, #tpu.memory_space<vmem>>, vector<32x128xbf16>
    %cst = arith.constant dense<0.000000e+00> : vector<16x128xf32>
    %2 = tpu.matmul %0, %1, %cst {dimension_numbers = #tpu.dot_dimension_numbers<[1], [0], [0], [1], [0, 0, 1, 1], [], []>} : vector<16x32xbf16>, vector<32x128xbf16>, vector<16x128xf32> -> vector<16x128xf32>
    %3 = arith.negf %2 : vector<16x128xf32>
    %4 = math.exp %3 : vector<16x128xf32>
    %cst_3 = arith.constant 1.000000e+00 : f32
    %5 = vector.broadcast %cst_3 : f32 to vector<16x128xf32>
    %6 = arith.addf %5, %4 : vector<16x128xf32>
    %7 = arith.divf %5, %6 : vector<16x128xf32>
    %8 = arith.mulf %2, %7 : vector<16x128xf32>
    %9 = arith.truncf %8 : vector<16x128xf32> to vector<16x128xbf16>
    %c0_4 = arith.constant 0 : index
    %c0_5 = arith.constant 0 : index
    %10 = vector.load %arg4[%c0_4, %c0_5] : memref<128x32xbf16, #tpu.memory_space<vmem>>, vector<128x32xbf16>
    %cst_6 = arith.constant dense<0.000000e+00> : vector<16x32xf32>
    %11 = tpu.matmul %9, %10, %cst_6 {dimension_numbers = #tpu.dot_dimension_numbers<[1], [0], [0], [1], [0, 0, 1, 1], [], []>} : vector<16x128xbf16>, vector<128x32xbf16>, vector<16x32xf32> -> vector<16x32xf32>
    %c0_7 = arith.constant 0 : index
    %c0_8 = arith.constant 0 : index
    %12 = vector.load %arg5[%c0_7, %c0_8] : memref<16x32xf32, #tpu.memory_space<vmem>>, vector<16x32xf32>
    tpu.vector_store %arg5[%c0_7, %c0_8], %11 {strides = array<i32>} : memref<16x32xf32, #tpu.memory_space<vmem>>, vector<16x32xf32>,
    return
  }
  func.func @transform_0(%arg0: i32, %arg1: i32) -> (i32, i32) {
    %c0_i32 = arith.constant 0 : i32
    %c0_i32_0 = arith.constant 0 : i32
    return %arg0, %c0_i32 : i32, i32
  }
  func.func @transform_1(%arg0: i32, %arg1: i32) -> (i32, i32) {
    %c0_i32 = arith.constant 0 : i32
    %c0_i32_0 = arith.constant 0 : i32
    return %c0_i32, %arg1 : i32, i32
  }
  func.func @transform_2(%arg0: i32, %arg1: i32) -> (i32, i32) {
    %c0_i32 = arith.constant 0 : i32
    %c0_i32_0 = arith.constant 0 : i32
    return %arg1, %c0_i32 : i32, i32
  }
  func.func @transform_3(%arg0: i32, %arg1: i32) -> (i32, i32) {
    %c0_i32 = arith.constant 0 : i32
    %c0_i32_0 = arith.constant 0 : i32
    return %arg0, %c0_i32 : i32, i32
  }
}

</mosaic_0001>

<llo_original>
// kernel: tpu_custom_call.1
$region0: #{tpu_custom_call.1}
  #allocation0 [shape = 'u32[]', space=smem, size = 0x4, offset = 0x4, fixed_abs, tag = 'smem constant byte address 0x4 - core index']
  #allocation1 [shape = 'u32[144,128]{1,0:T(1,128)}', space=vmem, size = 0x12000, scoped, tag = 'internal scratch']
  #allocation2 [shape = 'f32[16,32]{1,0:T(8,128)}', space=vmem, size = 0x2000, scoped, tag = 'scratch operand']
  %s0 = inlined_call_operand.vmem [shape: bf16[16,32], index: 0, kind: input, shape index: {}]
  %s1 = inlined_call_operand.vmem [shape: bf16[32,128], index: 1, kind: input, shape index: {}]
  %s2 = inlined_call_operand.vmem [shape: bf16[128,32], index: 2, kind: input, shape index: {}]
  %s3 = inlined_call_operand.hbm [shape: f32[16,32], index: 3, kind: output, shape index: {}]
  %s4 = sld [smem:[#allocation0]]
  $region22: #{tpu_custom_call.1} parent=0
    _
  %s6 = ssub.s32 1, %s4
  %s7 = scalar_select 0, %s6, %s4
  $region1: #{tpu_custom_call.1} parent=0
    #allocation3 [shape = 'u8[8192]{0}', space=vmem, size = 0x2000, scoped, tag = 'output window, operand 0, single buffered']
    #allocation4 [shape = 's32[1]{0}', space=sflag, size = 0x4, scoped, tag = 'scoped memory for tpu_custom_call.1']
    %8 = vsyncpa [#allocation4], 0
    // Predicated region
    $region2: #{tpu_custom_call.1} parent=1 // pred_check
      _
    $region3: #{tpu_custom_call.1} parent=1 // pred_check_branch
      %10 = sbr.rel (0) target = $region5
    $region4: #{tpu_custom_call.1} parent=1 // pred_region
      _
    $region5: #{tpu_custom_call.1} parent=1 // pred_fallthru
      _
    // Predicated region
    $region6: #{tpu_custom_call.1} parent=1 // pred_check
      _
    $region7: #{tpu_custom_call.1} parent=1 // pred_check_branch
      %12 = sbr.rel (0) target = $region9
    $region8: #{tpu_custom_call.1} parent=1 // pred_region
      _
    $region9: #{tpu_custom_call.1} parent=1 // pred_fallthru
      _
    // Predicated region
    $region10: #{tpu_custom_call.1} parent=1 // pred_check
      _
    $region11: #{tpu_custom_call.1} parent=1 // pred_check_branch
      %14 = sbr.rel (0) target = $region13
    $region12: #{tpu_custom_call.1} parent=1 // pred_region
      _
    $region13: #{tpu_custom_call.1} parent=1 // pred_fallthru
      _
    %v16 = vld [vmem:[%s0] sm:$0xf]
    %v17 = vld [vmem:[%s0 + $0x4] sm:$0xf]
    %v18 = vld [vmem:[%s1] sm:$0xf]
    %v19 = vld [vmem:[%s1 + $0x4] sm:$0xf]
    %v20 = vld [vmem:[%s1 + $0x8] sm:$0xf]
    %v21 = vld [vmem:[%s1 + $0xc] sm:$0xf]
    %v24 = vunpack.c.l.b16 %v16
    %v25 = vunpack.c.l.b16 %v17
    %v26 = vpack.c.b16 %v25, %v24
    %v31 = vunpack.c.l.b16 %v18
    %v32 = vunpack.c.l.b16 %v19
    %v33 = vunpack.c.l.b16 %v20
    %v34 = vunpack.c.l.b16 %v21
    %v35 = vpack.c.b16 %v32, %v31
    %v36 = vpack.c.b16 %v34, %v33
    %vm39 = vcmask 261120
    %v41 = vsel %vm39, %v26, 0
    %43 = vmatprep.subr.bf16.mxu0 0
    %44 = vmatpush1.bf16.msra.mxu0 0
    %45 = vmatprep.subr.bf16.mxu0 0
    %46 = vmatpush1.bf16.msra.mxu0 0
    %47 = vmatprep.subr.bf16.mxu0 0
    %48 = vmatpush1.bf16.msra.mxu0 0
    %49 = vmatprep.subr.bf16.mxu0 0
    %50 = vmatpush1.bf16.msra.mxu0 0
    %51 = vmatprep.subr.bf16.mxu0 0
    %52 = vmatpush1.bf16.msra.mxu0 0
    %53 = vmatprep.subr.bf16.mxu0 0
    %54 = vmatpush1.bf16.msra.mxu0 0
    %55 = vmatprep.subr.bf16.mxu0 0
    %56 = vmatpush1.bf16.msra.mxu0 %v36
    %57 = vmatprep.subr.bf16.mxu0 0
    %58 = vmatpush1.bf16.msra.mxu0 %v35
    %59 = vmatprep.subr.bf16.mxu0 0
    %60 = vmatpush2.bf16.msra.mxu0 0
    %61 = vmatprep.subr.bf16.mxu0 0
    %62 = vmatpush2.bf16.msra.mxu0 0
    %63 = vmatprep.subr.bf16.mxu0 0
    %64 = vmatpush2.bf16.msra.mxu0 0
    %65 = vmatprep.subr.bf16.mxu0 0
    %66 = vmatpush2.bf16.msra.mxu0 0
    %67 = vmatprep.subr.bf16.mxu0 0
    %68 = vmatpush2.bf16.msra.mxu0 0
    %69 = vmatprep.subr.bf16.mxu0 0
    %70 = vmatpush2.bf16.msra.mxu0 0
    %71 = vmatprep.subr.bf16.mxu0 0
    %72 = vmatpush2.bf16.msra.mxu0 0
    %73 = vmatprep.subr.bf16.mxu0 0
    %74 = vmatpush2.bf16.msra.mxu0 0
    %75 = vmatprep.mubr.bf16.mxu0 0
    %76 = vmatmul.mubr.bf16.gmra.mxu0 %v41
    %v77 = vpop.f32.mrf.mxu0
    %v78 = vadd.f32 0.0, %v77
    %v79 = vpop.f32.mrf.mxu0
    %v80 = vpop.f32.mrf.mxu0
    %v81 = vadd.f32 0.0, %v80
    %v82 = vpop.f32.mrf.mxu0
    %83 = vdwg.mxu0
    %v84 = vxor.u32 %v78, 2147483648
    %v85 = vxor.u32 %v81, 2147483648
    %v86 = vmul.f32 %v84, 1.442695
    %v87 = vpow.pop %v86
    %v88 = vmul.f32 %v85, 1.442695
    %v89 = vpow.pop %v88
    %v90 = vadd.f32 %v87, 1.0
    %v91 = vadd.f32 %v89, 1.0
    %v92 = vrcp.pop %v90
    %v93 = vmul.f32 1.0, %v92
    %v94 = vrcp.pop %v91
    %v95 = vmul.f32 1.0, %v94
    %v96 = vmul.f32 %v78, %v93
    %v97 = vmul.f32 %v81, %v95
    %v98 = vpack.c.bf16 %v97, %v96
    %v99 = vld [vmem:[%s2] sm:$0xf]
    %v100 = vld [vmem:[%s2 + $0x4] sm:$0xf]
    %v101 = vld [vmem:[%s2 + $0x8] sm:$0xf]
    %v102 = vld [vmem:[%s2 + $0xc] sm:$0xf]
    %v103 = vld [vmem:[%s2 + $0x10] sm:$0xf]
    %v104 = vld [vmem:[%s2 + $0x14] sm:$0xf]
    %v105 = vld [vmem:[%s2 + $0x18] sm:$0xf]
    %v106 = vld [vmem:[%s2 + $0x1c] sm:$0xf]
    %v107 = vld [vmem:[%s2 + $0x20] sm:$0xf]
    %v108 = vld [vmem:[%s2 + $0x24] sm:$0xf]
    %v109 = vld [vmem:[%s2 + $0x28] sm:$0xf]
    %v110 = vld [vmem:[%s2 + $0x2c] sm:$0xf]
    %v111 = vld [vmem:[%s2 + $0x30] sm:$0xf]
    %v112 = vld [vmem:[%s2 + $0x34] sm:$0xf]
    %v113 = vld [vmem:[%s2 + $0x38] sm:$0xf]
    %v114 = vld [vmem:[%s2 + $0x3c] sm:$0xf]
    %v131 = vunpack.c.l.b16 %v99
    %v132 = vunpack.c.l.b16 %v100
    %v133 = vunpack.c.l.b16 %v101
    %v134 = vunpack.c.l.b16 %v102
    %v135 = vunpack.c.l.b16 %v103
    %v136 = vunpack.c.l.b16 %v104
    %v137 = vunpack.c.l.b16 %v105
    %v138 = vunpack.c.l.b16 %v106
    %v139 = vunpack.c.l.b16 %v107
    %v140 = vunpack.c.l.b16 %v108
    %v141 = vunpack.c.l.b16 %v109
    %v142 = vunpack.c.l.b16 %v110
    %v143 = vunpack.c.l.b16 %v111
    %v144 = vunpack.c.l.b16 %v112
    %v145 = vunpack.c.l.b16 %v113
    %v146 = vunpack.c.l.b16 %v114
    %v147 = vpack.c.b16 %v132, %v131
    %v148 = vpack.c.b16 %v134, %v133
    %v149 = vpack.c.b16 %v136, %v135
    %v150 = vpack.c.b16 %v138, %v137
    %v151 = vpack.c.b16 %v140, %v139
    %v152 = vpack.c.b16 %v142, %v141
    %v153 = vpack.c.b16 %v144, %v143
    %v154 = vpack.c.b16 %v146, %v145
    %163 = vmatprep.subr.bf16.mxu0 0
    %164 = vmatpush1.bf16.msra.mxu0 %v154
    %165 = vmatprep.subr.bf16.mxu0 0
    %166 = vmatpush1.bf16.msra.mxu0 %v153
    %167 = vmatprep.subr.bf16.mxu0 0
    %168 = vmatpush1.bf16.msra.mxu0 %v152
    %169 = vmatprep.subr.bf16.mxu0 0
    %170 = vmatpush1.bf16.msra.mxu0 %v151
    %171 = vmatprep.subr.bf16.mxu0 0
    %172 = vmatpush1.bf16.msra.mxu0 %v150
    %173 = vmatprep.subr.bf16.mxu0 0
    %174 = vmatpush1.bf16.msra.mxu0 %v149
    %175 = vmatprep.subr.bf16.mxu0 0
    %176 = vmatpush1.bf16.msra.mxu0 %v148
    %177 = vmatprep.subr.bf16.mxu0 0
    %178 = vmatpush1.bf16.msra.mxu0 %v147
    %179 = vmatprep.subr.bf16.mxu0 0
    %180 = vmatpush2.bf16.msra.mxu0 0
    %181 = vmatprep.subr.bf16.mxu0 0
    %182 = vmatpush2.bf16.msra.mxu0 0
    %183 = vmatprep.subr.bf16.mxu0 0
    %184 = vmatpush2.bf16.msra.mxu0 0
    %185 = vmatprep.subr.bf16.mxu0 0
    %186 = vmatpush2.bf16.msra.mxu0 0
    %187 = vmatprep.subr.bf16.mxu0 0
    %188 = vmatpush2.bf16.msra.mxu0 0
    %189 = vmatprep.subr.bf16.mxu0 0
    %190 = vmatpush2.bf16.msra.mxu0 0
    %191 = vmatprep.subr.bf16.mxu0 0
    %192 = vmatpush2.bf16.msra.mxu0 0
    %193 = vmatprep.subr.bf16.mxu0 0
    %194 = vmatpush2.bf16.msra.mxu0 0
    %195 = vmatprep.mubr.bf16.mxu0 0
    %196 = vmatmul.mubr.bf16.gmra.mxu0 %v98
    %v197 = vpop.f32.mrf.mxu0
    %v198 = vadd.f32 0.0, %v197
    %v199 = vpop.f32.mrf.mxu0
    %v200 = vpop.f32.mrf.mxu0
    %v201 = vadd.f32 0.0, %v200
    %v202 = vpop.f32.mrf.mxu0
    %203 = vdwg.mxu0
    %204 = vst.msk [vmem:[#allocation3] sm:$0xff] %vm39, %v198
    %205 = vst.msk [vmem:[#allocation3 + $0x8] sm:$0xff] %vm39, %v201
    // Predicated region
    $region14: #{tpu_custom_call.1} parent=1 // pred_check
      _
    $region15: #{tpu_custom_call.1} parent=1 // pred_check_branch
      %207 = sbr.rel (0) target = $region17
    $region16: #{tpu_custom_call.1} parent=1 // pred_region
      %s209 = ssub.s32 256, 256
      %210 = vsyncadd [#allocation4], %s209
      %s211 = sshll.u32 [#allocation3], 4
      %s212 = int_to_ptr.vmem [resolvable:$true] %s211
      %217 = dma.vmem_to_hbm [thread:$0]  %s212, 256, %s3, [#allocation4], 128, 128, 8
    $region17: #{tpu_custom_call.1} parent=1 // pred_fallthru
      _
    // Predicated region
    $region18: #{tpu_custom_call.1} parent=1 // pred_check
      _
    $region19: #{tpu_custom_call.1} parent=1 // pred_check_branch
      %219 = sbr.rel (0) target = $region21
    $region20: #{tpu_custom_call.1} parent=1 // pred_region
      %220 = dma.done [#allocation4], 256
    $region21: #{tpu_custom_call.1} parent=1 // pred_fallthru
      _
    %221 = vsyncpa [#allocation4], 1

</llo_original>
